<compile_context>
chip_gen: v7x
topology: tpu7x:2x2x1
jax: 0.10.0
libtpu: 0.0.40
codegen_flags: <defaults>
</compile_context>

<pallas_src>
import math

import jax
import jax.numpy as jnp
from jax import lax
from jax.experimental import pallas as pl
from jax.experimental.pallas import tpu as pltpu


# --------------------------------------------------------------------------- #
# Kernel body
# --------------------------------------------------------------------------- #
def _complex_div_kernel(ha_ref, hb_ref, ra_ref, rb_ref, ta_ref, tb_ref):
    # Whole-tile elementwise work (VPU multiplies/adds + one EUP rsqrt/elem).
    ha = ha_ref[...].astype(jnp.float32)
    hb = hb_ref[...].astype(jnp.float32)
    ra = ra_ref[...].astype(jnp.float32)
    rb = rb_ref[...].astype(jnp.float32)

    inv_norm = lax.rsqrt(ra * ra + rb * rb)          # 1 / sqrt(r_a^2 + r_b^2)

    ta_ref[...] = ((ha * ra + hb * rb) * inv_norm).astype(ta_ref.dtype)
    tb_ref[...] = ((hb * ra - ha * rb) * inv_norm).astype(tb_ref.dtype)


# --------------------------------------------------------------------------- #
# Tiling / VMEM heuristics
# --------------------------------------------------------------------------- #
def _round_up(x, m):
    return ((x + m - 1) // m) * m


def _vmem_budget_and_limit():
    """Generation-aware operand-tile budget and an explicit scoped-VMEM limit."""
    phys = 64 << 20                                  # conservative fallback (v7x)
    try:
        info = pltpu.get_tpu_info()
        cap = getattr(info, "vmem_capacity_bytes", None)
        if cap:
            phys = int(cap)
    except Exception:
        pass
    # Double-buffered 6-stream working set: <= ~40% of physical VMEM, capped at
    # 28 MiB (past ~512-row tiles the roofline curve is flat anyway).
    budget = min(28 << 20, int(phys * 0.4))
    # Explicit scoped limit (overrides the 16 MiB v5e / 32 MiB v6e+v7x defaults)
    # with headroom for compiler internal scratch, clamped below physical.
    limit = min(phys - (4 << 20), budget + (16 << 20))
    limit = max(limit, budget + (4 << 20))
    limit = min(limit, phys)
    return budget, limit


def _choose_tiling(rows, cols, itemsize, vmem_budget_bytes):
    """Pick (block_rows, block_cols) for a lane-dense (rows, cols) slab.

    `cols` is either a multiple of 128 or the full (small) last dim.
    """
    sublane = max(8, 32 // itemsize)          # 8 f32, 16 bf16, 32 int8
    # Per-element VMEM cost: 6 streams x 2 buffers in the packed dtype, plus
    # ~5 full-tile f32 temporaries from the in-kernel upcast/compute (matters
    # for bf16/int8 inputs; harmless over-provisioning for f32).
    per_elem_bytes = 12 * itemsize + 5 * 4
    max_tile_elems = max(sublane * 128, vmem_budget_bytes // per_elem_bytes)

    # Column block: prefer the full lane-dense width; split on 128 boundaries
    # only when even one sublane-group of full-width rows would blow the
    # budget (guards the "full-width block" path against VMEM OOM).
    if sublane * cols <= max_tile_elems or cols <= 128:
        block_cols = cols
    else:
        block_cols = max(128, ((max_tile_elems // sublane) // 128) * 128)
        block_cols = min(block_cols, cols)

    # Row block: as many sublane groups as fit the per-tile element budget.
    if rows < sublane:
        block_rows = rows                      # full-dim block (always legal)
    else:
        rows_fit = max(1, max_tile_elems // block_cols)
        block_rows = max(sublane, (rows_fit // sublane) * sublane)
        block_rows = min(block_rows, _round_up(rows, sublane))

    def n_steps(br, bc):
        return pl.cdiv(rows, br) * pl.cdiv(cols, bc)

    # Target >= 4 grid steps so DMA-in / compute / DMA-out overlap and both
    # v7x TensorCores get work — but never shrink tiles below ~512 rows /
    # ~1 MiB (the measured roofline plateau).
    target_steps = 4
    min_tile_rows = 512
    min_tile_bytes = 1 << 20
    while n_steps(block_rows, block_cols) < target_steps:
        nr = ((block_rows // 2) // sublane) * sublane
        if nr >= sublane and (nr >= min_tile_rows or
                              nr * block_cols * itemsize >= min_tile_bytes):
            block_rows = nr
            continue
        break

    # If the grid is still a single step (e.g. rows <= sublane), split the
    # column axis so there are >= 2 steps (keeps one v7x TC from idling and
    # gives the pipeline at least two stages).
    while n_steps(block_rows, block_cols) < 2 and block_cols >= 256:
        block_cols = ((block_cols // 2) // 128) * 128

    return block_rows, block_cols


# --------------------------------------------------------------------------- #
# Wrapper
# --------------------------------------------------------------------------- #
def complex_div(h, r):
    """h, r are tuples (real, imag) of identically shaped arrays."""
    h_a, h_b = h
    r_a, r_b = r
    assert h_a.shape == h_b.shape == r_a.shape == r_b.shape

    orig_shape = h_a.shape
    dtype = h_a.dtype
    itemsize = jnp.dtype(dtype).itemsize
    total = math.prod(orig_shape) if orig_shape else 1
    last = orig_shape[-1] if orig_shape else 1

    # Lane-dense 2-D slab: keep the natural layout when the last dim is a
    # multiple of 128 (free reshape); otherwise flatten the elementwise problem
    # and pad to a 128-multiple lane width (avoids masked partial stores).
    if last % 128 == 0 and last > 0:
        cols, rows, pad_amount = last, total // last, 0
    else:
        cols = 512 if total >= 4096 else 128
        padded_total = _round_up(max(total, 1), cols)
        pad_amount = padded_total - total
        rows = padded_total // cols

    def _prep(x, pad_val):
        if pad_amount == 0:
            return x.reshape(rows, cols)
        flat = x.reshape(-1)
        flat = jnp.pad(flat, (0, pad_amount), constant_values=pad_val)
        return flat.reshape(rows, cols)

    # Pad r_a with 1 so padded lanes see |r| = 1 (no inf/NaN in the pads).
    ha2, hb2 = _prep(h_a, 0), _prep(h_b, 0)
    ra2, rb2 = _prep(r_a, 1), _prep(r_b, 0)

    vmem_budget, vmem_limit = _vmem_budget_and_limit()
    block_rows, block_cols = _choose_tiling(rows, cols, itemsize, vmem_budget)
    grid = (pl.cdiv(rows, block_rows), pl.cdiv(cols, block_cols))

    spec = pl.BlockSpec((block_rows, block_cols), lambda i, j: (i, j))

    cost = pl.CostEstimate(
        flops=11 * rows * cols,            # muls/adds per element
        transcendentals=rows * cols,       # one rsqrt per element
        bytes_accessed=6 * rows * cols * itemsize,
    )

    t_a2, t_b2 = pl.pallas_call(
        _complex_div_kernel,
        out_shape=(
            jax.ShapeDtypeStruct((rows, cols), dtype),
            jax.ShapeDtypeStruct((rows, cols), dtype),
        ),
        grid=grid,
        in_specs=[spec, spec, spec, spec],
        out_specs=(spec, spec),
        compiler_params=pltpu.CompilerParams(
            dimension_semantics=("parallel", "parallel"),
            vmem_limit_bytes=int(vmem_limit),
        ),
        cost_estimate=cost,
    )(ha2, hb2, ra2, rb2)

    def _post(x):
        if pad_amount == 0:
            return x.reshape(orig_shape)
        return x.reshape(-1)[:total].reshape(orig_shape)

    return (_post(t_a2), _post(t_b2))


# --------------------------------------------------------------------------- #
# Reference + self-test
# --------------------------------------------------------------------------- #
def _reference(h, r):
    r_norm = jnp.sqrt(r[0] ** 2 + r[1] ** 2)
    t_a = (h[0] * r[0] + h[1] * r[1]) / r_norm
    t_b = (h[1] * r[0] - h[0] * r[1]) / r_norm
    return t_a, t_b


if __name__ == "__main__":
    def make_inputs(key, shape, dtype=jnp.float32):
        k1, k2, k3, k4 = jax.random.split(key, 4)
        h = (jax.random.normal(k1, shape, dtype),
             jax.random.normal(k2, shape, dtype))
        r = (jax.random.normal(k3, shape, dtype),
             jax.random.normal(k4, shape, dtype))
        return h, r

    # 1) Lane-dense fast path (embedding-like shape, D multiple of 128).
    h, r = make_inputs(jax.random.PRNGKey(0), (8, 256))
    t_a, t_b = complex_div(h, r)
    jax.block_until_ready((t_a, t_b))
    ref_a, ref_b = _reference(h, r)
    assert t_a.shape == ref_a.shape and t_b.shape == ref_b.shape
    assert jnp.allclose(t_a, ref_a, rtol=1e-4, atol=1e-4), "real part mismatch"
    assert jnp.allclose(t_b, ref_b, rtol=1e-4, atol=1e-4), "imag part mismatch"

    # 2) Ragged last dim (not a multiple of 128): exercises the flatten+pad
    #    lane-dense slab path.
    h2, r2 = make_inputs(jax.random.PRNGKey(1), (10, 100))
    t2_a, t2_b = complex_div(h2, r2)
    jax.block_until_ready((t2_a, t2_b))
    ref2_a, ref2_b = _reference(h2, r2)
    assert t2_a.shape == ref2_a.shape and t2_b.shape == ref2_b.shape
    assert jnp.allclose(t2_a, ref2_a, rtol=1e-4, atol=1e-4), "ragged real mismatch"
    assert jnp.allclose(t2_b, ref2_b, rtol=1e-4, atol=1e-4), "ragged imag mismatch"

    print("KERNEL_OK")
</pallas_src>

<mosaic_0001>
module attributes {stable_mosaic.version = 11 : i64} {
  func.func @_complex_div_kernel(%arg0: i32, %arg1: i32, %arg2: memref<8x128xf32, #tpu.memory_space<vmem>>, %arg3: memref<8x128xf32, #tpu.memory_space<vmem>>, %arg4: memref<8x128xf32, #tpu.memory_space<vmem>>, %arg5: memref<8x128xf32, #tpu.memory_space<vmem>>, %arg6: memref<8x128xf32, #tpu.memory_space<vmem>>, %arg7: memref<8x128xf32, #tpu.memory_space<vmem>>) attributes {dimension_semantics = [#tpu.dimension_semantics<parallel>, #tpu.dimension_semantics<parallel>], iteration_bounds = array<i64: 1, 2>, scalar_prefetch = 0 : i64, scratch_operands = 0 : i64, tpu.core_type = #tpu.core_type<tc>, window_params = [{transform_indices = @transform_0, window_bounds = array<i64: 8, 128>}, {transform_indices = @transform_1, window_bounds = array<i64: 8, 128>}, {transform_indices = @transform_2, window_bounds = array<i64: 8, 128>}, {transform_indices = @transform_3, window_bounds = array<i64: 8, 128>}, {transform_indices = @transform_4, window_bounds = array<i64: 8, 128>}, {transform_indices = @transform_5, window_bounds = array<i64: 8, 128>}]} {
    %c0 = arith.constant 0 : index
    %c0_0 = arith.constant 0 : index
    %0 = vector.load %arg2[%c0, %c0_0] : memref<8x128xf32, #tpu.memory_space<vmem>>, vector<8x128xf32>
    %c0_1 = arith.constant 0 : index
    %c0_2 = arith.constant 0 : index
    %1 = vector.load %arg3[%c0_1, %c0_2] : memref<8x128xf32, #tpu.memory_space<vmem>>, vector<8x128xf32>
    %c0_3 = arith.constant 0 : index
    %c0_4 = arith.constant 0 : index
    %2 = vector.load %arg4[%c0_3, %c0_4] : memref<8x128xf32, #tpu.memory_space<vmem>>, vector<8x128xf32>
    %c0_5 = arith.constant 0 : index
    %c0_6 = arith.constant 0 : index
    %3 = vector.load %arg5[%c0_5, %c0_6] : memref<8x128xf32, #tpu.memory_space<vmem>>, vector<8x128xf32>
    %4 = arith.mulf %2, %2 : vector<8x128xf32>
    %5 = arith.mulf %3, %3 : vector<8x128xf32>
    %6 = arith.addf %4, %5 : vector<8x128xf32>
    %7 = math.rsqrt %6 : vector<8x128xf32>
    %8 = arith.mulf %0, %2 : vector<8x128xf32>
    %9 = arith.mulf %1, %3 : vector<8x128xf32>
    %10 = arith.addf %8, %9 : vector<8x128xf32>
    %11 = arith.mulf %10, %7 : vector<8x128xf32>
    %c0_7 = arith.constant 0 : index
    %c0_8 = arith.constant 0 : index
    %12 = vector.load %arg6[%c0_7, %c0_8] : memref<8x128xf32, #tpu.memory_space<vmem>>, vector<8x128xf32>
    tpu.vector_store %arg6[%c0_7, %c0_8], %11 {strides = array<i32>} : memref<8x128xf32, #tpu.memory_space<vmem>>, vector<8x128xf32>,
    %13 = arith.mulf %1, %2 : vector<8x128xf32>
    %14 = arith.mulf %0, %3 : vector<8x128xf32>
    %15 = arith.subf %13, %14 : vector<8x128xf32>
    %16 = arith.mulf %15, %7 : vector<8x128xf32>
    %c0_9 = arith.constant 0 : index
    %c0_10 = arith.constant 0 : index
    %17 = vector.load %arg7[%c0_9, %c0_10] : memref<8x128xf32, #tpu.memory_space<vmem>>, vector<8x128xf32>
    tpu.vector_store %arg7[%c0_9, %c0_10], %16 {strides = array<i32>} : memref<8x128xf32, #tpu.memory_space<vmem>>, vector<8x128xf32>,
    return
  }
  func.func @transform_0(%arg0: i32, %arg1: i32) -> (i32, i32) {
    %c0_i32 = arith.constant 0 : i32
    return %arg0, %arg1 : i32, i32
  }
  func.func @transform_1(%arg0: i32, %arg1: i32) -> (i32, i32) {
    %c0_i32 = arith.constant 0 : i32
    return %arg0, %arg1 : i32, i32
  }
  func.func @transform_2(%arg0: i32, %arg1: i32) -> (i32, i32) {
    %c0_i32 = arith.constant 0 : i32
    return %arg0, %arg1 : i32, i32
  }
  func.func @transform_3(%arg0: i32, %arg1: i32) -> (i32, i32) {
    %c0_i32 = arith.constant 0 : i32
    return %arg0, %arg1 : i32, i32
  }
  func.func @transform_4(%arg0: i32, %arg1: i32) -> (i32, i32) {
    %c0_i32 = arith.constant 0 : i32
    return %arg0, %arg1 : i32, i32
  }
  func.func @transform_5(%arg0: i32, %arg1: i32) -> (i32, i32) {
    %c0_i32 = arith.constant 0 : i32
    return %arg0, %arg1 : i32, i32
  }
}

</mosaic_0001>

<llo_original>
// kernel: tpu_custom_call.1
$region0: #{tpu_custom_call.1}
  #allocation0 [shape = 'u32[]', space=smem, size = 0x4, offset = 0x4, fixed_abs, tag = 'smem constant byte address 0x4 - core index']
  #allocation1 [shape = 'u32[144,128]{1,0:T(1,128)}', space=vmem, size = 0x12000, scoped, tag = 'internal scratch']
  %s0 = inlined_call_operand.hbm [shape: f32[8,256], index: 0, kind: input, shape index: {}]
  %s1 = inlined_call_operand.hbm [shape: f32[8,256], index: 1, kind: input, shape index: {}]
  %s2 = inlined_call_operand.hbm [shape: f32[8,256], index: 2, kind: input, shape index: {}]
  %s3 = inlined_call_operand.hbm [shape: f32[8,256], index: 3, kind: input, shape index: {}]
  %s4 = inlined_call_operand.hbm [shape: f32[8,256], index: 4, kind: output, shape index: {0}]
  %s5 = inlined_call_operand.hbm [shape: f32[8,256], index: 5, kind: output, shape index: {1}]
  %6 = xla_tuple %s4, %s5
  %s7 = sld [smem:[#allocation0]]
  $region73: #{tpu_custom_call.1} parent=0
    _
  %s9 = ssub.s32 1, %s7
  %s10 = scalar_select 0, %s9, %s7
  $region1: #{tpu_custom_call.1} parent=0
    #allocation2 [shape = 'u8[8192]{0}', space=vmem, size = 0x2000, scoped, tag = 'input window, operand 0']
    #allocation3 [shape = 's32[2]{0}', space=sflag, size = 0x8, scoped, tag = 'scoped memory for tpu_custom_call.1']
    #allocation4 [shape = 's32[2]{0}', space=sflag, size = 0x8, scoped, tag = 'scoped memory for tpu_custom_call.1']
    #allocation5 [shape = 'u8[8192]{0}', space=vmem, size = 0x2000, scoped, tag = 'input window, operand 1']
    #allocation6 [shape = 's32[2]{0}', space=sflag, size = 0x8, scoped, tag = 'scoped memory for tpu_custom_call.1']
    #allocation7 [shape = 'u8[8192]{0}', space=vmem, size = 0x2000, scoped, tag = 'input window, operand 2']
    #allocation8 [shape = 'u8[8192]{0}', space=vmem, size = 0x2000, scoped, tag = 'input window, operand 3']
    #allocation9 [shape = 's32[2]{0}', space=sflag, size = 0x8, scoped, tag = 'scoped memory for tpu_custom_call.1']
    #allocation10 [shape = 'u8[8192]{0}', space=vmem, size = 0x2000, scoped, tag = 'output window, operand 0']
    #allocation11 [shape = 'u8[8192]{0}', space=vmem, size = 0x2000, scoped, tag = 'output window, operand 1']
    #allocation12 [shape = 's32[2]{0}', space=sflag, size = 0x8, scoped, tag = 'scoped memory for tpu_custom_call.1']
    %11 = vsyncpa [#allocation3], 0
    %s12 = scalar_lea.sflag [#allocation3], 1
    %13 = vsyncpa %s12, 0
    %14 = vsyncpa [#allocation6], 0
    %s15 = scalar_lea.sflag [#allocation6], 1
    %16 = vsyncpa %s15, 0
    %17 = vsyncpa [#allocation9], 0
    %s18 = scalar_lea.sflag [#allocation9], 1
    %19 = vsyncpa %s18, 0
    %20 = vsyncpa [#allocation4], 0
    %s21 = scalar_lea.sflag [#allocation4], 1
    %22 = vsyncpa %s21, 0
    %23 = vsyncpa [#allocation12], 0
    %s24 = scalar_lea.sflag [#allocation12], 1
    %25 = vsyncpa %s24, 0
    loop: start=0, step=1, limit=4
    $region2: #{tpu_custom_call.1} parent=1 // loop_pre_header
      _
    $region3: #{tpu_custom_call.1} parent=1 // loop_header
      %s27 = sphi 0, %s31
      %p28 = scmp.ge.s32.totalorder %s27, 4
      %s34 = sphi 0, %s46
      %s35 = sphi 0, %s42
      %s36 = sphi 0, %s34
      %s37 = sphi 0, %s35
      %s38 = sphi 0, %s36
      %s39 = sphi 0, %s37
      %s51 = sphi 0, %s53
      %s54 = sphi 0, %s51
      %s55 = sphi 0, %s54
      %s71 = sphi 0, %s55
      %s79 = sphi 0, %s81
      %s82 = sphi 0, %s79
      %s83 = sphi 0, %s82
      %s99 = sphi 0, %s83
      %s107 = sphi 0, %s109
      %s110 = sphi 0, %s107
      %s111 = sphi 0, %s110
      %s127 = sphi 0, %s111
      %s135 = sphi 0, %s137
      %s138 = sphi 0, %s135
      %s139 = sphi 0, %s138
      %s155 = sphi 0, %s139
      %s163 = sphi 0, %s165
      %s166 = sphi 0, %s163
      %s167 = sphi 0, %s166
      %s183 = sphi 0, %s167
      %s191 = sphi 0, %s193
      %s194 = sphi 0, %s191
      %s195 = sphi 0, %s194
      %s211 = sphi 0, %s195
    $region4: #{tpu_custom_call.1} parent=1 // loop_header_branch
      %30 = sbr.rel (%p28) target = $region8
    $region5: #{tpu_custom_call.1} parent=1 // loop_body
      %s32 = ssub.s32 %s27, 1
      %s33 = ssub.s32 %s27, 2
      %s40 = sadd.s32 1, %s35
      %p41 = scmp.ge.s32.totalorder %s40, 2
      %s42 = scalar_select %p41, 0, %s40
      %s43 = sadd.s32 1, %s34
      %s44 = scalar_select %p41, %s43, %s34
      %p45 = scmp.ge.s32.totalorder %s44, 1
      %s46 = scalar_select %p45, 0, %s44
      %s47 = ssub.s32 %s34, %s46
      %s48 = ssub.s32 %s35, %s42
      %s49 = sor.u32 %s47, %s48
      %p50 = scmp.eq.s32.totalorder %s49, 0
      %s52 = sadd.s32 %s51, 1
      %s53 = scalar_select %p50, %s51, %s52
      %p56 = pneg %p50
      %p57 = scmp.eq.s32.totalorder %s27, 1
      %p58 = por %p56, %p57
      %p59 = scmp.ne.s32.totalorder %s51, %s54
      %p60 = scmp.eq.s32.totalorder %s27, 0
      %p61 = por %p59, %p60
      %p62 = scmp.ne.s32.totalorder %s51, %s54
      %p63 = scmp.eq.s32.totalorder %s32, 1
      %p64 = por %p62, %p63
      %p65 = scmp.ne.s32.totalorder %s54, %s55
      %p66 = scmp.eq.s32.totalorder %s32, 0
      %p67 = por %p65, %p66
      %p68 = scmp.ne.s32.totalorder %s54, %s55
      %p69 = scmp.eq.s32.totalorder %s33, 1
      %p70 = por %p68, %p69
      %p72 = scmp.ne.s32.totalorder %s55, %s71
      %p73 = scmp.eq.s32.totalorder %s33, 0
      %p74 = por %p72, %p73
      %s75 = ssub.s32 %s34, %s46
      %s76 = ssub.s32 %s35, %s42
      %s77 = sor.u32 %s75, %s76
      %p78 = scmp.eq.s32.totalorder %s77, 0
      %s80 = sadd.s32 %s79, 1
      %s81 = scalar_select %p78, %s79, %s80
      %p84 = pneg %p78
      %p85 = scmp.eq.s32.totalorder %s27, 1
      %p86 = por %p84, %p85
      %p87 = scmp.ne.s32.totalorder %s79, %s82
      %p88 = scmp.eq.s32.totalorder %s27, 0
      %p89 = por %p87, %p88
      %p90 = scmp.ne.s32.totalorder %s79, %s82
      %p91 = scmp.eq.s32.totalorder %s32, 1
      %p92 = por %p90, %p91
      %p93 = scmp.ne.s32.totalorder %s82, %s83
      %p94 = scmp.eq.s32.totalorder %s32, 0
      %p95 = por %p93, %p94
      %p96 = scmp.ne.s32.totalorder %s82, %s83
      %p97 = scmp.eq.s32.totalorder %s33, 1
      %p98 = por %p96, %p97
      %p100 = scmp.ne.s32.totalorder %s83, %s99
      %p101 = scmp.eq.s32.totalorder %s33, 0
      %p102 = por %p100, %p101
      %s103 = ssub.s32 %s34, %s46
      %s104 = ssub.s32 %s35, %s42
      %s105 = sor.u32 %s103, %s104
      %p106 = scmp.eq.s32.totalorder %s105, 0
      %s108 = sadd.s32 %s107, 1
      %s109 = scalar_select %p106, %s107, %s108
      %p112 = pneg %p106
      %p113 = scmp.eq.s32.totalorder %s27, 1
      %p114 = por %p112, %p113
      %p115 = scmp.ne.s32.totalorder %s107, %s110
      %p116 = scmp.eq.s32.totalorder %s27, 0
      %p117 = por %p115, %p116
      %p118 = scmp.ne.s32.totalorder %s107, %s110
      %p119 = scmp.eq.s32.totalorder %s32, 1
      %p120 = por %p118, %p119
      %p121 = scmp.ne.s32.totalorder %s110, %s111
      %p122 = scmp.eq.s32.totalorder %s32, 0
      %p123 = por %p121, %p122
      %p124 = scmp.ne.s32.totalorder %s110, %s111
      %p125 = scmp.eq.s32.totalorder %s33, 1
      %p126 = por %p124, %p125
      %p128 = scmp.ne.s32.totalorder %s111, %s127
      %p129 = scmp.eq.s32.totalorder %s33, 0
      %p130 = por %p128, %p129
      %s131 = ssub.s32 %s34, %s46
      %s132 = ssub.s32 %s35, %s42
      %s133 = sor.u32 %s131, %s132
      %p134 = scmp.eq.s32.totalorder %s133, 0
      %s136 = sadd.s32 %s135, 1
      %s137 = scalar_select %p134, %s135, %s136
      %p140 = pneg %p134
      %p141 = scmp.eq.s32.totalorder %s27, 1
      %p142 = por %p140, %p141
      %p143 = scmp.ne.s32.totalorder %s135, %s138
      %p144 = scmp.eq.s32.totalorder %s27, 0
      %p145 = por %p143, %p144
      %p146 = scmp.ne.s32.totalorder %s135, %s138
      %p147 = scmp.eq.s32.totalorder %s32, 1
      %p148 = por %p146, %p147
      %p149 = scmp.ne.s32.totalorder %s138, %s139
      %p150 = scmp.eq.s32.totalorder %s32, 0
      %p151 = por %p149, %p150
      %p152 = scmp.ne.s32.totalorder %s138, %s139
      %p153 = scmp.eq.s32.totalorder %s33, 1
      %p154 = por %p152, %p153
      %p156 = scmp.ne.s32.totalorder %s139, %s155
      %p157 = scmp.eq.s32.totalorder %s33, 0
      %p158 = por %p156, %p157
      %s159 = ssub.s32 %s34, %s46
      %s160 = ssub.s32 %s35, %s42
      %s161 = sor.u32 %s159, %s160
      %p162 = scmp.eq.s32.totalorder %s161, 0
      %s164 = sadd.s32 %s163, 1
      %s165 = scalar_select %p162, %s163, %s164
      %p168 = pneg %p162
      %p169 = scmp.eq.s32.totalorder %s27, 1
      %p170 = por %p168, %p169
      %p171 = scmp.ne.s32.totalorder %s163, %s166
      %p172 = scmp.eq.s32.totalorder %s27, 0
      %p173 = por %p171, %p172
      %p174 = scmp.ne.s32.totalorder %s163, %s166
      %p175 = scmp.eq.s32.totalorder %s32, 1
      %p176 = por %p174, %p175
      %p177 = scmp.ne.s32.totalorder %s166, %s167
      %p178 = scmp.eq.s32.totalorder %s32, 0
      %p179 = por %p177, %p178
      %p180 = scmp.ne.s32.totalorder %s166, %s167
      %p181 = scmp.eq.s32.totalorder %s33, 1
      %p182 = por %p180, %p181
      %p184 = scmp.ne.s32.totalorder %s167, %s183
      %p185 = scmp.eq.s32.totalorder %s33, 0
      %p186 = por %p184, %p185
      %s187 = ssub.s32 %s34, %s46
      %s188 = ssub.s32 %s35, %s42
      %s189 = sor.u32 %s187, %s188
      %p190 = scmp.eq.s32.totalorder %s189, 0
      %s192 = sadd.s32 %s191, 1
      %s193 = scalar_select %p190, %s191, %s192
      %p196 = pneg %p190
      %p197 = scmp.eq.s32.totalorder %s27, 1
      %p198 = por %p196, %p197
      %p199 = scmp.ne.s32.totalorder %s191, %s194
      %p200 = scmp.eq.s32.totalorder %s27, 0
      %p201 = por %p199, %p200
      %p202 = scmp.ne.s32.totalorder %s191, %s194
      %p203 = scmp.eq.s32.totalorder %s32, 1
      %p204 = por %p202, %p203
      %p205 = scmp.ne.s32.totalorder %s194, %s195
      %p206 = scmp.eq.s32.totalorder %s32, 0
      %p207 = por %p205, %p206
      %p208 = scmp.ne.s32.totalorder %s194, %s195
      %p209 = scmp.eq.s32.totalorder %s33, 1
      %p210 = por %p208, %p209
      %p212 = scmp.ne.s32.totalorder %s195, %s211
      %p213 = scmp.eq.s32.totalorder %s33, 0
      %p214 = por %p212, %p213
      %p215 = scmp.le.s32.totalorder 1, %s27
      %p216 = scmp.lt.s32.totalorder %s27, 3
      %p217 = pnand %p215, %p216
      %p218 = pneg %p217
      // Predicated region
      $region9: #{tpu_custom_call.1} parent=5 // pred_check
        _
      $region10: #{tpu_custom_call.1} parent=5 // pred_check_branch
        %220 = sbr.rel (%p217) target = $region12
      $region11: #{tpu_custom_call.1} parent=5 // pred_region
        %s221 = ssub.s32 %s27, 1
      $region12: #{tpu_custom_call.1} parent=5 // pred_fallthru
        _
      %p222 = scmp.lt.s32.totalorder %s27, 2
      // Predicated region
      $region13: #{tpu_custom_call.1} parent=5 // pred_check
        %p223 = pneg %p222
      $region14: #{tpu_custom_call.1} parent=5 // pred_check_branch
        %225 = sbr.rel (%p223) target = $region16
      $region15: #{tpu_custom_call.1} parent=5 // pred_region
        // Predicated region
        $region17: #{tpu_custom_call.1} parent=15 // pred_check
          %p226 = pneg %p61
        $region18: #{tpu_custom_call.1} parent=15 // pred_check_branch
          %228 = sbr.rel (%p226) target = $region20
        $region19: #{tpu_custom_call.1} parent=15 // pred_region
          %s229 = sand.u32 %s51, 1
          %s230 = scalar_lea.sflag [#allocation3], %s229
          %s231 = sand.u32 %s51, 1
          %s232 = smul.addr %s231, 8
          %s233 = scalar_lea.vmem [#allocation2], %s232
          %s235 = ssub.s32 128, 128
          %236 = vsyncadd %s230, %s235
          %s237 = smul.addr %s34, 2
          %s238 = sadd.s32 %s35, %s237
          %s239 = smul.addr %s238, 128
          %s240 = scalar_lea.hbm %s0, %s239
          %s242 = sshll.u32 %s233, 4
          %s243 = int_to_ptr.vmem [resolvable:$true] %s242
          %245 = dma.hbm_to_vmem [thread:$0]  %s240, 128, %s243, %s230
        $region20: #{tpu_custom_call.1} parent=15 // pred_fallthru
          _
        // Predicated region
        $region21: #{tpu_custom_call.1} parent=15 // pred_check
          %p246 = pneg %p89
        $region22: #{tpu_custom_call.1} parent=15 // pred_check_branch
          %248 = sbr.rel (%p246) target = $region24
        $region23: #{tpu_custom_call.1} parent=15 // pred_region
          %s249 = sand.u32 %s27, 1
          %s250 = scalar_lea.sflag [#allocation6], %s249
          %s251 = sand.u32 %s79, 1
          %s252 = smul.addr %s251, 8
          %s253 = scalar_lea.vmem [#allocation5], %s252
          %s255 = ssub.s32 128, 128
          %256 = vsyncadd %s250, %s255
          %s257 = smul.addr %s34, 2
          %s258 = sadd.s32 %s35, %s257
          %s259 = smul.addr %s258, 128
          %s260 = scalar_lea.hbm %s1, %s259
          %s262 = sshll.u32 %s253, 4
          %s263 = int_to_ptr.vmem [resolvable:$true] %s262
          %265 = dma.hbm_to_vmem [thread:$0]  %s260, 128, %s263, %s250
        $region24: #{tpu_custom_call.1} parent=15 // pred_fallthru
          _
        // Predicated region
        $region25: #{tpu_custom_call.1} parent=15 // pred_check
          %p266 = pneg %p117
        $region26: #{tpu_custom_call.1} parent=15 // pred_check_branch
          %268 = sbr.rel (%p266) target = $region28
        $region27: #{tpu_custom_call.1} parent=15 // pred_region
          %s269 = sand.u32 %s27, 1
          %s270 = scalar_lea.sflag [#allocation6], %s269
          %s271 = sand.u32 %s107, 1
          %s272 = smul.addr %s271, 8
          %s273 = scalar_lea.vmem [#allocation7], %s272
          %s275 = ssub.s32 128, 128
          %276 = vsyncadd %s270, %s275
          %s277 = smul.addr %s34, 2
          %s278 = sadd.s32 %s35, %s277
          %s279 = smul.addr %s278, 128
          %s280 = scalar_lea.hbm %s2, %s279
          %s282 = sshll.u32 %s273, 4
          %s283 = int_to_ptr.vmem [resolvable:$true] %s282
          %285 = dma.hbm_to_vmem [thread:$0]  %s280, 128, %s283, %s270
        $region28: #{tpu_custom_call.1} parent=15 // pred_fallthru
          _
        // Predicated region
        $region29: #{tpu_custom_call.1} parent=15 // pred_check
          %p286 = pneg %p145
        $region30: #{tpu_custom_call.1} parent=15 // pred_check_branch
          %288 = sbr.rel (%p286) target = $region32
        $region31: #{tpu_custom_call.1} parent=15 // pred_region
          %s289 = sand.u32 %s135, 1
          %s290 = scalar_lea.sflag [#allocation9], %s289
          %s291 = sand.u32 %s135, 1
          %s292 = smul.addr %s291, 8
          %s293 = scalar_lea.vmem [#allocation8], %s292
          %s295 = ssub.s32 128, 128
          %296 = vsyncadd %s290, %s295
          %s297 = smul.addr %s34, 2
          %s298 = sadd.s32 %s35, %s297
          %s299 = smul.addr %s298, 128
          %s300 = scalar_lea.hbm %s3, %s299
          %s302 = sshll.u32 %s293, 4
          %s303 = int_to_ptr.vmem [resolvable:$true] %s302
          %305 = dma.hbm_to_vmem [thread:$0]  %s300, 128, %s303, %s290
        $region32: #{tpu_custom_call.1} parent=15 // pred_fallthru
          _
      $region16: #{tpu_custom_call.1} parent=5 // pred_fallthru
        _
      %p306 = scmp.le.s32.totalorder 1, %s27
      %p307 = scmp.lt.s32.totalorder %s27, 3
      %p308 = pnand %p306, %p307
      %p309 = pneg %p308
      // Predicated region
      $region33: #{tpu_custom_call.1} parent=5 // pred_check
        _
      $region34: #{tpu_custom_call.1} parent=5 // pred_check_branch
        %311 = sbr.rel (%p308) target = $region36
      $region35: #{tpu_custom_call.1} parent=5 // pred_region
        %s312 = ssub.s32 %s27, 1
        %s313 = sand.u32 %s54, 1
        %s314 = scalar_lea.sflag [#allocation3], %s313
        %s315 = sand.u32 %s54, 1
        %s316 = smul.addr %s315, 8
        %s317 = scalar_lea.vmem [#allocation2], %s316
        // Predicated region
        $region37: #{tpu_custom_call.1} parent=35 // pred_check
          %p318 = pneg %p67
        $region38: #{tpu_custom_call.1} parent=35 // pred_check_branch
          %320 = sbr.rel (%p318) target = $region40
        $region39: #{tpu_custom_call.1} parent=35 // pred_region
          %321 = dma.done %s314, 128
        $region40: #{tpu_custom_call.1} parent=35 // pred_fallthru
          _
        %s322 = sand.u32 %s32, 1
        %s323 = scalar_lea.sflag [#allocation6], %s322
        %s324 = sand.u32 %s82, 1
        %s325 = smul.addr %s324, 8
        %s326 = scalar_lea.vmem [#allocation5], %s325
        // Predicated region
        $region41: #{tpu_custom_call.1} parent=35 // pred_check
          %p327 = pneg %p95
        $region42: #{tpu_custom_call.1} parent=35 // pred_check_branch
          %329 = sbr.rel (%p327) target = $region44
        $region43: #{tpu_custom_call.1} parent=35 // pred_region
          %330 = dma.done %s323, 128
        $region44: #{tpu_custom_call.1} parent=35 // pred_fallthru
          _
        %s331 = sand.u32 %s32, 1
        %s332 = scalar_lea.sflag [#allocation6], %s331
        %s333 = sand.u32 %s110, 1
        %s334 = smul.addr %s333, 8
        %s335 = scalar_lea.vmem [#allocation7], %s334
        // Predicated region
        $region45: #{tpu_custom_call.1} parent=35 // pred_check
          %p336 = pneg %p123
        $region46: #{tpu_custom_call.1} parent=35 // pred_check_branch
          %338 = sbr.rel (%p336) target = $region48
        $region47: #{tpu_custom_call.1} parent=35 // pred_region
          %339 = dma.done %s332, 128
        $region48: #{tpu_custom_call.1} parent=35 // pred_fallthru
          _
        %s340 = sand.u32 %s138, 1
        %s341 = scalar_lea.sflag [#allocation9], %s340
        %s342 = sand.u32 %s138, 1
        %s343 = smul.addr %s342, 8
        %s344 = scalar_lea.vmem [#allocation8], %s343
        // Predicated region
        $region49: #{tpu_custom_call.1} parent=35 // pred_check
          %p345 = pneg %p151
        $region50: #{tpu_custom_call.1} parent=35 // pred_check_branch
          %347 = sbr.rel (%p345) target = $region52
        $region51: #{tpu_custom_call.1} parent=35 // pred_region
          %348 = dma.done %s341, 128
        $region52: #{tpu_custom_call.1} parent=35 // pred_fallthru
          _
        %s349 = sand.u32 %s54, 1
        %s350 = scalar_lea.sflag [#allocation3], %s349
        %s351 = sand.u32 %s54, 1
        %s352 = smul.addr %s351, 8
        %s353 = scalar_lea.vmem [#allocation2], %s352
        %p354 = pneg %p67
        %p355 = pneg %p64
        %s356 = sand.u32 %s32, 1
        %s357 = scalar_lea.sflag [#allocation6], %s356
        %s358 = sand.u32 %s82, 1
        %s359 = smul.addr %s358, 8
        %s360 = scalar_lea.vmem [#allocation5], %s359
        %p361 = pneg %p95
        %p362 = pneg %p92
        %s363 = sand.u32 %s32, 1
        %s364 = scalar_lea.sflag [#allocation6], %s363
        %s365 = sand.u32 %s110, 1
        %s366 = smul.addr %s365, 8
        %s367 = scalar_lea.vmem [#allocation7], %s366
        %p368 = pneg %p123
        %p369 = pneg %p120
        %s370 = sand.u32 %s138, 1
        %s371 = scalar_lea.sflag [#allocation9], %s370
        %s372 = sand.u32 %s138, 1
        %s373 = smul.addr %s372, 8
        %s374 = scalar_lea.vmem [#allocation8], %s373
        %p375 = pneg %p151
        %p376 = pneg %p148
        %p377 = pneg %p179
        %p378 = pneg %p176
        %s379 = sand.u32 %s166, 1
        %s380 = scalar_lea.sflag [#allocation4], %s379
        %s381 = sand.u32 %s166, 1
        %s382 = smul.addr %s381, 8
        %s383 = scalar_lea.vmem [#allocation10], %s382
        %p384 = pneg %p207
        %p385 = pneg %p204
        %s386 = sand.u32 %s194, 1
        %s387 = scalar_lea.sflag [#allocation12], %s386
        %s388 = sand.u32 %s194, 1
        %s389 = smul.addr %s388, 8
        %s390 = scalar_lea.vmem [#allocation11], %s389
        %v391 = vld [vmem:[%s317] sm:$0xff]
        %v392 = vld [vmem:[%s326] sm:$0xff]
        %v393 = vld [vmem:[%s335] sm:$0xff]
        %v394 = vld [vmem:[%s344] sm:$0xff]
        %v395 = vmul.f32 %v393, %v393
        %v396 = vmul.f32 %v394, %v394
        %v397 = vadd.f32 %v395, %v396
        %v398 = vrsqrt.pop %v397
        %v399 = vmul.f32 %v391, %v393
        %v400 = vmul.f32 %v392, %v394
        %v401 = vadd.f32 %v399, %v400
        %v402 = vmul.f32 %v401, %v398
        %403 = vst [vmem:[%s383] sm:$0xff] %v402
        %v404 = vmul.f32 %v392, %v393
        %v405 = vmul.f32 %v391, %v394
        %v406 = vsub.f32 %v404, %v405
        %v407 = vmul.f32 %v406, %v398
        %408 = vst [vmem:[%s390] sm:$0xff] %v407
        %s409 = sand.u32 %s166, 1
        %s410 = scalar_lea.sflag [#allocation4], %s409
        %s411 = sand.u32 %s166, 1
        %s412 = smul.addr %s411, 8
        %s413 = scalar_lea.vmem [#allocation10], %s412
        %s414 = sand.u32 %s194, 1
        %s415 = scalar_lea.sflag [#allocation12], %s414
        %s416 = sand.u32 %s194, 1
        %s417 = smul.addr %s416, 8
        %s418 = scalar_lea.vmem [#allocation11], %s417
        // Predicated region
        $region53: #{tpu_custom_call.1} parent=35 // pred_check
          %p419 = pneg %p176
        $region54: #{tpu_custom_call.1} parent=35 // pred_check_branch
          %421 = sbr.rel (%p419) target = $region56
        $region55: #{tpu_custom_call.1} parent=35 // pred_region
          %s423 = ssub.s32 128, 128
          %424 = vsyncadd %s410, %s423
          %s425 = smul.addr %s36, 2
          %s426 = sadd.s32 %s37, %s425
          %s427 = smul.addr %s426, 128
          %s428 = scalar_lea.hbm %s4, %s427
          %s430 = sshll.u32 %s413, 4
          %s431 = int_to_ptr.vmem [resolvable:$true] %s430
          %433 = dma.vmem_to_hbm [thread:$0]  %s431, 128, %s428, %s410
        $region56: #{tpu_custom_call.1} parent=35 // pred_fallthru
          _
        // Predicated region
        $region57: #{tpu_custom_call.1} parent=35 // pred_check
          %p434 = pneg %p204
        $region58: #{tpu_custom_call.1} parent=35 // pred_check_branch
          %436 = sbr.rel (%p434) target = $region60
        $region59: #{tpu_custom_call.1} parent=35 // pred_region
          %s438 = ssub.s32 128, 128
          %439 = vsyncadd %s415, %s438
          %s440 = smul.addr %s36, 2
          %s441 = sadd.s32 %s37, %s440
          %s442 = smul.addr %s441, 128
          %s443 = scalar_lea.hbm %s5, %s442
          %s445 = sshll.u32 %s418, 4
          %s446 = int_to_ptr.vmem [resolvable:$true] %s445
          %448 = dma.vmem_to_hbm [thread:$0]  %s446, 128, %s443, %s415
        $region60: #{tpu_custom_call.1} parent=35 // pred_fallthru
          _
      $region36: #{tpu_custom_call.1} parent=5 // pred_fallthru
        _
      %p449 = scmp.le.s32.totalorder 2, %s27
      // Predicated region
      $region61: #{tpu_custom_call.1} parent=5 // pred_check
        %p450 = pneg %p449
      $region62: #{tpu_custom_call.1} parent=5 // pred_check_branch
        %452 = sbr.rel (%p450) target = $region64
      $region63: #{tpu_custom_call.1} parent=5 // pred_region
        %s453 = ssub.s32 %s27, 2
        // Predicated region
        $region65: #{tpu_custom_call.1} parent=63 // pred_check
          %p454 = pneg %p182
        $region66: #{tpu_custom_call.1} parent=63 // pred_check_branch
          %456 = sbr.rel (%p454) target = $region68
        $region67: #{tpu_custom_call.1} parent=63 // pred_region
          %s457 = sand.u32 %s167, 1
          %s458 = scalar_lea.sflag [#allocation4], %s457
          %s459 = sand.u32 %s167, 1
          %s460 = smul.addr %s459, 8
          %s461 = scalar_lea.vmem [#allocation10], %s460
          %462 = dma.done %s458, 128
        $region68: #{tpu_custom_call.1} parent=63 // pred_fallthru
          _
        // Predicated region
        $region69: #{tpu_custom_call.1} parent=63 // pred_check
          %p463 = pneg %p210
        $region70: #{tpu_custom_call.1} parent=63 // pred_check_branch
          %465 = sbr.rel (%p463) target = $region72
        $region71: #{tpu_custom_call.1} parent=63 // pred_region
          %s466 = sand.u32 %s195, 1
          %s467 = scalar_lea.sflag [#allocation12], %s466
          %s468 = sand.u32 %s195, 1
          %s469 = smul.addr %s468, 8
          %s470 = scalar_lea.vmem [#allocation11], %s469
          %471 = dma.done %s467, 128
        $region72: #{tpu_custom_call.1} parent=63 // pred_fallthru
          _
      $region64: #{tpu_custom_call.1} parent=5 // pred_fallthru
        _
    $region6: #{tpu_custom_call.1} parent=1 // loop_footer
      %s31 = sadd.s32 1, %s27
    $region7: #{tpu_custom_call.1} parent=1 // loop_footer_branch
      %26 = sbr.rel target = $region3
    $region8: #{tpu_custom_call.1} parent=1 // loop_exit
      _
    %472 = vsyncpa [#allocation3], 1
    %s473 = scalar_lea.sflag [#allocation3], 1
    %474 = vsyncpa %s473, 1
    %475 = vsyncpa [#allocation6], 1
    %s476 = scalar_lea.sflag [#allocation6], 1
    %477 = vsyncpa %s476, 1
    %478 = vsyncpa [#allocation9], 1
    %s479 = scalar_lea.sflag [#allocation9], 1
    %480 = vsyncpa %s479, 1
    %481 = vsyncpa [#allocation4], 1
    %s482 = scalar_lea.sflag [#allocation4], 1
    %483 = vsyncpa %s482, 1
    %484 = vsyncpa [#allocation12], 1
    %s485 = scalar_lea.sflag [#allocation12], 1
    %486 = vsyncpa %s485, 1

</llo_original>
